<compile_context>
chip_gen: v7x
topology: tpu7x:2x2x1
jax: 0.10.0
libtpu: 0.0.40
codegen_flags: <defaults>
</compile_context>

<pallas_src>
from functools import partial

import jax
import jax.numpy as jnp
from jax import lax
from jax.experimental import pallas as pl
from jax.experimental.pallas import tpu as pltpu


_MAX_STATIC_CLASS_UNROLL = 16   # above this, use fori_loop over the class axis


def _pixel_ce_kernel(pred_ref, label_ref, loss_ref, cnt_ref, *,
                     spatial_size, tile_s, mask_tail, ignore_index):
    # pred_ref : (bn, C, tile_s)  logits block (native dtype) in VMEM
    # label_ref: (bn, 1, tile_s)  int class ids in VMEM (native int dtype)
    # loss_ref : (1, 1, 1, 1)     per-tile partial sum of CE
    # cnt_ref  : (1, 1, 1, 1)     per-tile count of contributing pixels
    bn, C, ts = pred_ref.shape
    j = pl.program_id(1)
    f32 = jnp.float32

    lbl = label_ref[:, 0, :].astype(jnp.int32)                     # (bn, ts)

    if C <= _MAX_STATIC_CLASS_UNROLL:
        # Pass 1: running max over classes (VMEM re-reads are nearly free,
        # only one live (bn, ts) temporary instead of C of them).
        m = pred_ref[:, 0, :].astype(f32)
        for c in range(1, C):
            m = jnp.maximum(m, pred_ref[:, c, :].astype(f32))
        # Pass 2: exp-sum (EUP) + label gather as elementwise selects (VPU).
        ssum = jnp.zeros_like(m)
        picked = jnp.zeros_like(m)
        for c in range(C):
            xc = pred_ref[:, c, :].astype(f32)
            ssum = ssum + jnp.exp(xc - m)
            picked = jnp.where(lbl == c, xc, picked)
    else:
        # Large class counts (19/21/150): modestly-unrolled fori_loop keeps
        # code size / live ranges bounded; class plane indexed with traced c.
        def _plane(c):
            return pred_ref[:, pl.ds(c, 1), :].reshape(bn, ts).astype(f32)

        m = lax.fori_loop(1, C, lambda c, acc: jnp.maximum(acc, _plane(c)),
                          _plane(0), unroll=4)

        def _acc(c, carry):
            ssum, picked = carry
            xc = _plane(c)
            return (ssum + jnp.exp(xc - m), jnp.where(lbl == c, xc, picked))

        ssum, picked = lax.fori_loop(
            0, C, _acc, (jnp.zeros_like(m), jnp.zeros_like(m)), unroll=4)

    per_pixel = (m + jnp.log(ssum)) - picked                       # (bn, ts)

    # CrossEntropyLoss default ignore_index handling + tail-tile masking.
    valid = lbl != ignore_index
    if mask_tail:
        col = lax.broadcasted_iota(jnp.int32, (bn, ts), 1) + j * tile_s
        valid = jnp.logical_and(valid, col < spatial_size)
    per_pixel = jnp.where(valid, per_pixel, 0.0)

    # Single cross-lane reduce per tile (XLU slot; VALU/EUP are the busy units).
    loss_ref[...] = jnp.sum(per_pixel).reshape(1, 1, 1, 1)
    cnt_ref[...] = jnp.sum(valid.astype(f32)).reshape(1, 1, 1, 1)


def _choose_tiles(N, C, S, pred_itemsize, label_itemsize):
    """Pick (block_n, tile_s, mask_tail, vmem_limit) against the real VMEM size."""
    try:
        vmem_cap = int(pltpu.get_tpu_info().vmem_capacity_bytes)
    except Exception:
        vmem_cap = 64 * 1024 * 1024        # v7x physical; conservative everywhere
    vmem_limit = int(min(vmem_cap * 3 // 4, 96 * 1024 * 1024))
    budget = vmem_limit * 3 // 5           # headroom for compiler scratch / spills

    def est(bn, ts):
        pred_blk = bn * C * ts * pred_itemsize
        lbl_blk = bn * 8 * ts * label_itemsize   # (bn, 1, ts) pads to 8 sublanes
        temps = 6 * bn * ts * 4                  # m/ssum/picked/xc/per_pixel/mask f32
        return 2 * (pred_blk + lbl_blk) + temps  # x2: double-buffered input blocks

    # Spatial tile: whole flattened row if small enough, else the largest
    # lane-dense (multiple-of-128) tile that fits, capped at 2048 lanes.
    if S <= 4096 and est(1, S) <= budget:
        tile_s = S
    else:
        tile_s = 128
        while tile_s * 2 <= min(2048, S) and est(1, tile_s * 2) <= budget:
            tile_s *= 2
    mask_tail = (S % tile_s) != 0

    # Batch block: largest divisor of N that still fits the budget.
    block_n = 1
    for d in range(1, N + 1):
        if N % d == 0 and est(d, tile_s) <= budget:
            block_n = d
    return block_n, tile_s, mask_tail, vmem_limit


def pixel_ce_loss(pred, label, *, ignore_index=-100):
    """forward(pred, label) of PixelCELoss with default constructor args."""
    N, C, H, W = pred.shape
    assert label.shape == (N, H, W), (label.shape, (N, H, W))
    S = H * W

    # Free metadata reshapes for contiguous NCHW; keep native dtypes over HBM
    # (bf16 pred / uint8 labels ship at their narrow widths).
    pred3 = pred.reshape(N, C, S)
    label3 = label.reshape(N, 1, S)

    block_n, tile_s, mask_tail, vmem_limit = _choose_tiles(
        N, C, S, pred.dtype.itemsize, label.dtype.itemsize)
    grid_n = N // block_n
    grid_s = pl.cdiv(S, tile_s)

    kernel = partial(_pixel_ce_kernel,
                     spatial_size=S, tile_s=tile_s,
                     mask_tail=mask_tail, ignore_index=ignore_index)

    loss_parts, cnt_parts = pl.pallas_call(
        kernel,
        out_shape=(jax.ShapeDtypeStruct((grid_n, grid_s, 1, 1), jnp.float32),
                   jax.ShapeDtypeStruct((grid_n, grid_s, 1, 1), jnp.float32)),
        grid_spec=pltpu.PrefetchScalarGridSpec(
            num_scalar_prefetch=0,
            grid=(grid_n, grid_s),
            in_specs=[
                pl.BlockSpec((block_n, C, tile_s), lambda i, j: (i, 0, j)),
                pl.BlockSpec((block_n, 1, tile_s), lambda i, j: (i, 0, j)),
            ],
            out_specs=(
                pl.BlockSpec((1, 1, 1, 1), lambda i, j: (i, j, 0, 0)),
                pl.BlockSpec((1, 1, 1, 1), lambda i, j: (i, j, 0, 0)),
            ),
        ),
        compiler_params=pltpu.CompilerParams(
            # Disjoint per-tile partial outputs -> both axes parallel
            # (v7x megacore shards them across both TensorCores).
            dimension_semantics=("parallel", "parallel"),
            vmem_limit_bytes=vmem_limit),
    )(pred3, label3)

    total = jnp.sum(loss_parts, dtype=jnp.float32)
    count = jnp.sum(cnt_parts, dtype=jnp.float32)
    return total / count


def _reference_loss(pred, label):
    """Pure-JAX reference of CrossEntropyLoss(reduction='mean') per pixel."""
    logp = jax.nn.log_softmax(pred.astype(jnp.float32), axis=1)      # (N,C,H,W)
    picked = jnp.take_along_axis(
        logp, label[:, None, :, :].astype(jnp.int32), axis=1)[:, 0]  # (N,H,W)
    return -jnp.mean(picked)


if __name__ == "__main__":
    key = jax.random.PRNGKey(0)
    k1, k2 = jax.random.split(key)

    N, C, H, W = 2, 4, 16, 16
    pred = jax.random.normal(k1, (N, C, H, W), dtype=jnp.float32)      # logits
    label = jax.random.randint(k2, (N, H, W), 0, C, dtype=jnp.int32)   # class ids

    loss = jax.block_until_ready(pixel_ce_loss(pred, label))
    ref = jax.block_until_ready(_reference_loss(pred, label))

    assert jnp.allclose(loss, ref, rtol=1e-5, atol=1e-6), (loss, ref)
    print("KERNEL_OK")
</pallas_src>

<mosaic_0001>
module attributes {stable_mosaic.version = 11 : i64} {
  func.func @_pixel_ce_kernel(%arg0: i32, %arg1: i32, %arg2: memref<2x4x256xf32, #tpu.memory_space<vmem>>, %arg3: memref<2x1x256xi32, #tpu.memory_space<vmem>>, %arg4: memref<1x1x1x1xf32, #tpu.memory_space<vmem>>, %arg5: memref<1x1x1x1xf32, #tpu.memory_space<vmem>>) attributes {dimension_semantics = [#tpu.dimension_semantics<parallel>, #tpu.dimension_semantics<parallel>], iteration_bounds = array<i64: 1, 1>, scalar_prefetch = 0 : i64, scratch_operands = 0 : i64, tpu.core_type = #tpu.core_type<tc>, window_params = [{transform_indices = @transform_0, window_bounds = array<i64: 2, 4, 256>}, {transform_indices = @transform_1, window_bounds = array<i64: 2, 1, 256>}, {transform_indices = @transform_2, window_bounds = array<i64: 1, 1, 1, 1>}, {transform_indices = @transform_3, window_bounds = array<i64: 1, 1, 1, 1>}]} {
    %c0 = arith.constant 0 : index
    %c0_0 = arith.constant 0 : index
    %c0_1 = arith.constant 0 : index
    %0 = vector.load %arg3[%c0, %c0_0, %c0_1] : memref<2x1x256xi32, #tpu.memory_space<vmem>>, vector<2x1x256xi32>
    %1 = vector.shape_cast %0 : vector<2x1x256xi32> to vector<2x256xi32>
    %c0_2 = arith.constant 0 : index
    %c0_3 = arith.constant 0 : index
    %c0_4 = arith.constant 0 : index
    %2 = vector.load %arg2[%c0_2, %c0_3, %c0_4] : memref<2x4x256xf32, #tpu.memory_space<vmem>>, vector<2x1x256xf32>
    %3 = vector.shape_cast %2 : vector<2x1x256xf32> to vector<2x256xf32>
    %c0_5 = arith.constant 0 : index
    %c1 = arith.constant 1 : index
    %c0_6 = arith.constant 0 : index
    %4 = vector.load %arg2[%c0_5, %c1, %c0_6] : memref<2x4x256xf32, #tpu.memory_space<vmem>>, vector<2x1x256xf32>
    %5 = vector.shape_cast %4 : vector<2x1x256xf32> to vector<2x256xf32>
    %6 = arith.maximumf %3, %5 : vector<2x256xf32>
    %c0_7 = arith.constant 0 : index
    %c2 = arith.constant 2 : index
    %c0_8 = arith.constant 0 : index
    %7 = vector.load %arg2[%c0_7, %c2, %c0_8] : memref<2x4x256xf32, #tpu.memory_space<vmem>>, vector<2x1x256xf32>
    %8 = vector.shape_cast %7 : vector<2x1x256xf32> to vector<2x256xf32>
    %9 = arith.maximumf %6, %8 : vector<2x256xf32>
    %c0_9 = arith.constant 0 : index
    %c3 = arith.constant 3 : index
    %c0_10 = arith.constant 0 : index
    %10 = vector.load %arg2[%c0_9, %c3, %c0_10] : memref<2x4x256xf32, #tpu.memory_space<vmem>>, vector<2x1x256xf32>
    %11 = vector.shape_cast %10 : vector<2x1x256xf32> to vector<2x256xf32>
    %12 = arith.maximumf %9, %11 : vector<2x256xf32>
    %cst = arith.constant 0.000000e+00 : f32
    %13 = vector.broadcast %cst : f32 to vector<2x256xf32>
    %cst_11 = arith.constant 0.000000e+00 : f32
    %14 = vector.broadcast %cst_11 : f32 to vector<2x256xf32>
    %c0_12 = arith.constant 0 : index
    %c0_13 = arith.constant 0 : index
    %c0_14 = arith.constant 0 : index
    %15 = vector.load %arg2[%c0_12, %c0_13, %c0_14] : memref<2x4x256xf32, #tpu.memory_space<vmem>>, vector<2x1x256xf32>
    %16 = vector.shape_cast %15 : vector<2x1x256xf32> to vector<2x256xf32>
    %17 = arith.subf %16, %12 : vector<2x256xf32>
    %18 = math.exp %17 : vector<2x256xf32>
    %19 = arith.addf %13, %18 : vector<2x256xf32>
    %c0_i32 = arith.constant 0 : i32
    %20 = vector.broadcast %c0_i32 : i32 to vector<2x256xi32>
    %21 = arith.cmpi eq, %1, %20 : vector<2x256xi32>
    %22 = arith.select %21, %16, %14 : vector<2x256xi1>, vector<2x256xf32>
    %c0_15 = arith.constant 0 : index
    %c1_16 = arith.constant 1 : index
    %c0_17 = arith.constant 0 : index
    %23 = vector.load %arg2[%c0_15, %c1_16, %c0_17] : memref<2x4x256xf32, #tpu.memory_space<vmem>>, vector<2x1x256xf32>
    %24 = vector.shape_cast %23 : vector<2x1x256xf32> to vector<2x256xf32>
    %25 = arith.subf %24, %12 : vector<2x256xf32>
    %26 = math.exp %25 : vector<2x256xf32>
    %27 = arith.addf %19, %26 : vector<2x256xf32>
    %c1_i32 = arith.constant 1 : i32
    %28 = vector.broadcast %c1_i32 : i32 to vector<2x256xi32>
    %29 = arith.cmpi eq, %1, %28 : vector<2x256xi32>
    %30 = arith.select %29, %24, %22 : vector<2x256xi1>, vector<2x256xf32>
    %c0_18 = arith.constant 0 : index
    %c2_19 = arith.constant 2 : index
    %c0_20 = arith.constant 0 : index
    %31 = vector.load %arg2[%c0_18, %c2_19, %c0_20] : memref<2x4x256xf32, #tpu.memory_space<vmem>>, vector<2x1x256xf32>
    %32 = vector.shape_cast %31 : vector<2x1x256xf32> to vector<2x256xf32>
    %33 = arith.subf %32, %12 : vector<2x256xf32>
    %34 = math.exp %33 : vector<2x256xf32>
    %35 = arith.addf %27, %34 : vector<2x256xf32>
    %c2_i32 = arith.constant 2 : i32
    %36 = vector.broadcast %c2_i32 : i32 to vector<2x256xi32>
    %37 = arith.cmpi eq, %1, %36 : vector<2x256xi32>
    %38 = arith.select %37, %32, %30 : vector<2x256xi1>, vector<2x256xf32>
    %c0_21 = arith.constant 0 : index
    %c3_22 = arith.constant 3 : index
    %c0_23 = arith.constant 0 : index
    %39 = vector.load %arg2[%c0_21, %c3_22, %c0_23] : memref<2x4x256xf32, #tpu.memory_space<vmem>>, vector<2x1x256xf32>
    %40 = vector.shape_cast %39 : vector<2x1x256xf32> to vector<2x256xf32>
    %41 = arith.subf %40, %12 : vector<2x256xf32>
    %42 = math.exp %41 : vector<2x256xf32>
    %43 = arith.addf %35, %42 : vector<2x256xf32>
    %c3_i32 = arith.constant 3 : i32
    %44 = vector.broadcast %c3_i32 : i32 to vector<2x256xi32>
    %45 = arith.cmpi eq, %1, %44 : vector<2x256xi32>
    %46 = arith.select %45, %40, %38 : vector<2x256xi1>, vector<2x256xf32>
    %47 = math.log %43 : vector<2x256xf32>
    %48 = arith.addf %12, %47 : vector<2x256xf32>
    %49 = arith.subf %48, %46 : vector<2x256xf32>
    %c-100_i32 = arith.constant -100 : i32
    %50 = vector.broadcast %c-100_i32 : i32 to vector<2x256xi32>
    %51 = arith.cmpi ne, %1, %50 : vector<2x256xi32>
    %cst_24 = arith.constant 0.000000e+00 : f32
    %52 = vector.broadcast %cst_24 : f32 to vector<2x256xf32>
    %53 = arith.select %51, %49, %52 : vector<2x256xi1>, vector<2x256xf32>
    %54 = vector.shape_cast %53 : vector<2x256xf32> to vector<1x2x256xf32>
    %cst_25 = arith.constant dense<0.000000e+00> : vector<1xf32>
    %55 = vector.multi_reduction <add>, %54, %cst_25 [1, 2] : vector<1x2x256xf32> to vector<1xf32>
    %56 = vector.shape_cast %55 : vector<1xf32> to vector<1x1x1xf32>
    %57 = vector.extract %56[0, 0, 0] : f32 from vector<1x1x1xf32>
    %58 = vector.broadcast %57 : f32 to vector<1x1x1x1xf32>
    %c0_26 = arith.constant 0 : index
    %c0_27 = arith.constant 0 : index
    %c0_28 = arith.constant 0 : index
    %c0_29 = arith.constant 0 : index
    %59 = vector.load %arg4[%c0_26, %c0_27, %c0_28, %c0_29] : memref<1x1x1x1xf32, #tpu.memory_space<vmem>>, vector<1x1x1x1xf32>
    tpu.vector_store %arg4[%c0_26, %c0_27, %c0_28, %c0_29], %58 {strides = array<i32>} : memref<1x1x1x1xf32, #tpu.memory_space<vmem>>, vector<1x1x1x1xf32>,
    %60 = arith.extui %51 : vector<2x256xi1> to vector<2x256xi32>
    %61 = arith.sitofp %60 : vector<2x256xi32> to vector<2x256xf32>
    %62 = vector.shape_cast %61 : vector<2x256xf32> to vector<1x2x256xf32>
    %cst_30 = arith.constant dense<0.000000e+00> : vector<1xf32>
    %63 = vector.multi_reduction <add>, %62, %cst_30 [1, 2] : vector<1x2x256xf32> to vector<1xf32>
    %64 = vector.shape_cast %63 : vector<1xf32> to vector<1x1x1xf32>
    %65 = vector.extract %64[0, 0, 0] : f32 from vector<1x1x1xf32>
    %66 = vector.broadcast %65 : f32 to vector<1x1x1x1xf32>
    %c0_31 = arith.constant 0 : index
    %c0_32 = arith.constant 0 : index
    %c0_33 = arith.constant 0 : index
    %c0_34 = arith.constant 0 : index
    %67 = vector.load %arg5[%c0_31, %c0_32, %c0_33, %c0_34] : memref<1x1x1x1xf32, #tpu.memory_space<vmem>>, vector<1x1x1x1xf32>
    tpu.vector_store %arg5[%c0_31, %c0_32, %c0_33, %c0_34], %66 {strides = array<i32>} : memref<1x1x1x1xf32, #tpu.memory_space<vmem>>, vector<1x1x1x1xf32>,
    return
  }
  func.func @transform_0(%arg0: i32, %arg1: i32) -> (i32, i32, i32) {
    %c0_i32 = arith.constant 0 : i32
    %c0_i32_0 = arith.constant 0 : i32
    return %arg0, %c0_i32, %arg1 : i32, i32, i32
  }
  func.func @transform_1(%arg0: i32, %arg1: i32) -> (i32, i32, i32) {
    %c0_i32 = arith.constant 0 : i32
    %c0_i32_0 = arith.constant 0 : i32
    return %arg0, %c0_i32, %arg1 : i32, i32, i32
  }
  func.func @transform_2(%arg0: i32, %arg1: i32) -> (i32, i32, i32, i32) {
    %c0_i32 = arith.constant 0 : i32
    %c0_i32_0 = arith.constant 0 : i32
    %c0_i32_1 = arith.constant 0 : i32
    return %arg0, %arg1, %c0_i32, %c0_i32_0 : i32, i32, i32, i32
  }
  func.func @transform_3(%arg0: i32, %arg1: i32) -> (i32, i32, i32, i32) {
    %c0_i32 = arith.constant 0 : i32
    %c0_i32_0 = arith.constant 0 : i32
    %c0_i32_1 = arith.constant 0 : i32
    return %arg0, %arg1, %c0_i32, %c0_i32_0 : i32, i32, i32, i32
  }
}

</mosaic_0001>

<llo_original>
// kernel: tpu_custom_call.1
$region0: #{tpu_custom_call.1}
  #allocation0 [shape = 'u32[]', space=smem, size = 0x4, offset = 0x4, fixed_abs, tag = 'smem constant byte address 0x4 - core index']
  #allocation1 [shape = 'u32[144,128]{1,0:T(1,128)}', space=vmem, size = 0x12000, scoped, tag = 'internal scratch']
  %s0 = inlined_call_operand.hbm [shape: f32[2,4,256], index: 0, kind: input, shape index: {}]
  %s1 = inlined_call_operand.hbm [shape: s32[2,1,256], index: 1, kind: input, shape index: {}]
  %s2 = inlined_call_operand.hbm [shape: f32[1,1,1,1], index: 2, kind: output, shape index: {0}]
  %s3 = inlined_call_operand.hbm [shape: f32[1,1,1,1], index: 3, kind: output, shape index: {1}]
  %4 = xla_tuple %s2, %s3
  %s5 = sld [smem:[#allocation0]]
  $region34: #{tpu_custom_call.1} parent=0
    _
  %s7 = ssub.s32 1, %s5
  %s8 = scalar_select 0, %s7, %s5
  $region1: #{tpu_custom_call.1} parent=0
    #allocation2 [shape = 'u8[8192]{0}', space=vmem, size = 0x2000, scoped, tag = 'input window, operand 0, single buffered']
    #allocation3 [shape = 's32[1]{0}', space=sflag, size = 0x4, scoped, tag = 'scoped memory for tpu_custom_call.1']
    #allocation4 [shape = 's32[1]{0}', space=sflag, size = 0x4, scoped, tag = 'scoped memory for tpu_custom_call.1']
    #allocation5 [shape = 'u8[2048]{0}', space=vmem, size = 0x800, scoped, tag = 'input window, operand 1, single buffered']
    #allocation6 [shape = 's32[1]{0}', space=sflag, size = 0x4, scoped, tag = 'scoped memory for tpu_custom_call.1']
    #allocation7 [shape = 'u8[512]{0}', space=vmem, size = 0x400, scoped, tag = 'output window, operand 0, single buffered']
    #allocation8 [shape = 'u8[512]{0}', space=vmem, size = 0x400, scoped, tag = 'output window, operand 1, single buffered']
    #allocation9 [shape = 's32[1]{0}', space=sflag, size = 0x4, scoped, tag = 'scoped memory for tpu_custom_call.1']
    %9 = vsyncpa [#allocation3], 0
    %10 = vsyncpa [#allocation6], 0
    %11 = vsyncpa [#allocation4], 0
    %12 = vsyncpa [#allocation9], 0
    // Predicated region
    $region2: #{tpu_custom_call.1} parent=1 // pred_check
      _
    $region3: #{tpu_custom_call.1} parent=1 // pred_check_branch
      %14 = sbr.rel (0) target = $region5
    $region4: #{tpu_custom_call.1} parent=1 // pred_region
      %s16 = ssub.s32 256, 256
      %17 = vsyncadd [#allocation3], %s16
      %s18 = sshll.u32 [#allocation2], 4
      %s19 = int_to_ptr.vmem [resolvable:$true] %s18
      %24 = dma.hbm_to_vmem [thread:$0]  %s0, 256, %s19, [#allocation3], 128, 128, 8
    $region5: #{tpu_custom_call.1} parent=1 // pred_fallthru
      _
    // Predicated region
    $region6: #{tpu_custom_call.1} parent=1 // pred_check
      _
    $region7: #{tpu_custom_call.1} parent=1 // pred_check_branch
      %26 = sbr.rel (0) target = $region9
    $region8: #{tpu_custom_call.1} parent=1 // pred_region
      %s28 = ssub.s32 64, 64
      %29 = vsyncadd [#allocation6], %s28
      %s30 = sshll.u32 [#allocation5], 4
      %s31 = int_to_ptr.vmem [resolvable:$true] %s30
      %36 = dma.hbm_to_vmem [thread:$0]  %s1, 64, %s31, [#allocation6], 32, 32, 2
    $region9: #{tpu_custom_call.1} parent=1 // pred_fallthru
      _
    // Predicated region
    $region10: #{tpu_custom_call.1} parent=1 // pred_check
      _
    $region11: #{tpu_custom_call.1} parent=1 // pred_check_branch
      %38 = sbr.rel (0) target = $region13
    $region12: #{tpu_custom_call.1} parent=1 // pred_region
      %39 = dma.done [#allocation3], 256
    $region13: #{tpu_custom_call.1} parent=1 // pred_fallthru
      _
    // Predicated region
    $region14: #{tpu_custom_call.1} parent=1 // pred_check
      _
    $region15: #{tpu_custom_call.1} parent=1 // pred_check_branch
      %41 = sbr.rel (0) target = $region17
    $region16: #{tpu_custom_call.1} parent=1 // pred_region
      %42 = dma.done [#allocation6], 64
    $region17: #{tpu_custom_call.1} parent=1 // pred_fallthru
      _
    %v43 = vld [vmem:[#allocation5] sm:$0x3]
    %v44 = vld [vmem:[#allocation5 + $0x2] sm:$0x3]
    %v45 = vld [vmem:[#allocation2] ss:$4 sm:$0x3]
    %s46 = scalar_lea.vmem [#allocation2], 8
    %v47 = vld [vmem:[%s46] ss:$4 sm:$0x3]
    %s48 = scalar_lea.vmem [#allocation2], 1
    %v49 = vld [vmem:[%s48] ss:$4 sm:$0x3]
    %s50 = scalar_lea.vmem [#allocation2], 9
    %v51 = vld [vmem:[%s50] ss:$4 sm:$0x3]
    %v52 = vmax.f32 %v45, %v49
    %v53 = vmax.f32 %v47, %v51
    %s54 = scalar_lea.vmem [#allocation2], 2
    %v55 = vld [vmem:[%s54] ss:$4 sm:$0x3]
    %s56 = scalar_lea.vmem [#allocation2], 10
    %v57 = vld [vmem:[%s56] ss:$4 sm:$0x3]
    %v58 = vmax.f32 %v52, %v55
    %v59 = vmax.f32 %v53, %v57
    %s60 = scalar_lea.vmem [#allocation2], 3
    %v61 = vld [vmem:[%s60] ss:$4 sm:$0x3]
    %s62 = scalar_lea.vmem [#allocation2], 11
    %v63 = vld [vmem:[%s62] ss:$4 sm:$0x3]
    %v64 = vmax.f32 %v58, %v61
    %v65 = vmax.f32 %v59, %v63
    %v66 = vsub.f32 %v45, %v64
    %v67 = vsub.f32 %v47, %v65
    %v68 = vmul.f32 %v66, 1.442695
    %v69 = vpow.pop %v68
    %v70 = vmul.f32 %v67, 1.442695
    %v71 = vpow.pop %v70
    %v72 = vadd.f32 %v69, 0.0
    %v73 = vadd.f32 %v71, 0.0
    %vm74 = vcmp.eq.s32.totalorder %v43, 0
    %vm75 = vcmp.eq.s32.totalorder %v44, 0
    %v76 = vsel %vm74, %v45, 0.0
    %v77 = vsel %vm75, %v47, 0.0
    %v78 = vsub.f32 %v49, %v64
    %v79 = vsub.f32 %v51, %v65
    %v80 = vmul.f32 %v78, 1.442695
    %v81 = vpow.pop %v80
    %v82 = vmul.f32 %v79, 1.442695
    %v83 = vpow.pop %v82
    %v84 = vadd.f32 %v72, %v81
    %v85 = vadd.f32 %v73, %v83
    %vm86 = vcmp.eq.s32.totalorder %v43, 1
    %vm87 = vcmp.eq.s32.totalorder %v44, 1
    %v88 = vsel %vm86, %v49, %v76
    %v89 = vsel %vm87, %v51, %v77
    %v90 = vsub.f32 %v55, %v64
    %v91 = vsub.f32 %v57, %v65
    %v92 = vmul.f32 %v90, 1.442695
    %v93 = vpow.pop %v92
    %v94 = vmul.f32 %v91, 1.442695
    %v95 = vpow.pop %v94
    %v96 = vadd.f32 %v84, %v93
    %v97 = vadd.f32 %v85, %v95
    %vm98 = vcmp.eq.s32.totalorder %v43, 2
    %vm99 = vcmp.eq.s32.totalorder %v44, 2
    %v100 = vsel %vm98, %v55, %v88
    %v101 = vsel %vm99, %v57, %v89
    %v102 = vsub.f32 %v61, %v64
    %v103 = vsub.f32 %v63, %v65
    %v104 = vmul.f32 %v102, 1.442695
    %v105 = vpow.pop %v104
    %v106 = vmul.f32 %v103, 1.442695
    %v107 = vpow.pop %v106
    %v108 = vadd.f32 %v96, %v105
    %v109 = vadd.f32 %v97, %v107
    %vm110 = vcmp.eq.s32.totalorder %v43, 3
    %vm111 = vcmp.eq.s32.totalorder %v44, 3
    %v112 = vsel %vm110, %v61, %v100
    %v113 = vsel %vm111, %v63, %v101
    %v114 = vlog2.pop %v108
    %v115 = vmul.f32 %v114, 0.6931472
    %v116 = vlog2.pop %v109
    %v117 = vmul.f32 %v116, 0.6931472
    %v118 = vadd.f32 %v64, %v115
    %v119 = vadd.f32 %v65, %v117
    %v120 = vsub.f32 %v118, %v112
    %v121 = vsub.f32 %v119, %v113
    %vm122 = vcmp.ne.s32.totalorder %v43, 4294967196
    %vm123 = vcmp.ne.s32.totalorder %v44, 4294967196
    %v124 = vsel %vm122, %v120, 0.0
    %v125 = vsel %vm123, %v121, 0.0
    %v128 = vcombine.low %v124, %v125
    %v130 = vunpack.c.l.s4 1966171168
    %v131 = vunpack.c.0.s8 %v130
    %v132 = vlaneseq
    %v133 = vshrl.u32 %v132, 7
    %v134 = vsub.s32 %v131, %v133
    %v135 = vrot.slane %v128, %v134
    %v136 = vcombine.high %v135, %v135
    %v138 = vunpack.c.l.s4 1966171168
    %v139 = vunpack.c.0.s8 %v138
    %v140 = vlaneseq
    %v141 = vshrl.u32 %v140, 7
    %v142 = vsub.s32 %v139, %v141
    %v143 = vrot.slane %v135, %v142
    %v145 = vunpack.c.l.s4 1966171168
    %v146 = vunpack.c.0.s8 %v145
    %v147 = vlaneseq
    %v148 = vshrl.u32 %v147, 7
    %v149 = vsub.s32 %v146, %v148
    %v150 = vrot.slane %v136, %v149
    %vm153 = vcmask 1041408
    %v154 = vsel %vm153, %v143, 0.0
    %v155 = vsel %vm153, %v150, 0.0
    %v156 = vadd.f32 %v154, %v155
    %157 = vadd.xlane.f32.xlu0 %v156
    %v158 = vpop.xlane.xlu0 %157
    %v159 = vrot.slane %v158, 4
    %v160 = vadd.f32 %v158, %v159
    %v161 = vrot.slane %v160, 2
    %v162 = vadd.f32 %v160, %v161
    %v163 = vrot.slane %v162, 1
    %v164 = vadd.f32 %v162, %v163
    %s165 = vtos %v164
    %v166 = vstv %s165
    %vm167 = vcmask 0
    %168 = vst.msk [vmem:[#allocation7] sm:$0x1] %vm167, %v166
    %v169 = vsel %vm122, 1, 0
    %v170 = vsel %vm123, 1, 0
    %v171 = vcvt.s32.f32 %v169
    %v172 = vcvt.s32.f32 %v170
    %v175 = vcombine.low %v171, %v172
    %v177 = vunpack.c.l.s4 1966171168
    %v178 = vunpack.c.0.s8 %v177
    %v179 = vlaneseq
    %v180 = vshrl.u32 %v179, 7
    %v181 = vsub.s32 %v178, %v180
    %v182 = vrot.slane %v175, %v181
    %v183 = vcombine.high %v182, %v182
    %v185 = vunpack.c.l.s4 1966171168
    %v186 = vunpack.c.0.s8 %v185
    %v187 = vlaneseq
    %v188 = vshrl.u32 %v187, 7
    %v189 = vsub.s32 %v186, %v188
    %v190 = vrot.slane %v182, %v189
    %v192 = vunpack.c.l.s4 1966171168
    %v193 = vunpack.c.0.s8 %v192
    %v194 = vlaneseq
    %v195 = vshrl.u32 %v194, 7
    %v196 = vsub.s32 %v193, %v195
    %v197 = vrot.slane %v183, %v196
    %v200 = vsel %vm153, %v190, 0.0
    %v201 = vsel %vm153, %v197, 0.0
    %v202 = vadd.f32 %v200, %v201
    %203 = vadd.xlane.f32.xlu0 %v202
    %v204 = vpop.xlane.xlu0 %203
    %v205 = vrot.slane %v204, 4
    %v206 = vadd.f32 %v204, %v205
    %v207 = vrot.slane %v206, 2
    %v208 = vadd.f32 %v206, %v207
    %v209 = vrot.slane %v208, 1
    %v210 = vadd.f32 %v208, %v209
    %s211 = vtos %v210
    %v212 = vstv %s211
    %213 = vst.msk [vmem:[#allocation8] sm:$0x1] %vm167, %v212
    // Predicated region
    $region18: #{tpu_custom_call.1} parent=1 // pred_check
      _
    $region19: #{tpu_custom_call.1} parent=1 // pred_check_branch
      %215 = sbr.rel (0) target = $region21
    $region20: #{tpu_custom_call.1} parent=1 // pred_region
      %s217 = ssub.s32 16, 16
      %218 = vsyncadd [#allocation4], %s217
      %s220 = sshll.u32 [#allocation7], 4
      %s221 = int_to_ptr.vmem [resolvable:$true] %s220
      %223 = dma.vmem_to_hbm [thread:$0]  %s221, 16, %s2, [#allocation4]
    $region21: #{tpu_custom_call.1} parent=1 // pred_fallthru
      _
    // Predicated region
    $region22: #{tpu_custom_call.1} parent=1 // pred_check
      _
    $region23: #{tpu_custom_call.1} parent=1 // pred_check_branch
      %225 = sbr.rel (0) target = $region25
    $region24: #{tpu_custom_call.1} parent=1 // pred_region
      %s227 = ssub.s32 16, 16
      %228 = vsyncadd [#allocation9], %s227
      %s230 = sshll.u32 [#allocation8], 4
      %s231 = int_to_ptr.vmem [resolvable:$true] %s230
      %233 = dma.vmem_to_hbm [thread:$0]  %s231, 16, %s3, [#allocation9]
    $region25: #{tpu_custom_call.1} parent=1 // pred_fallthru
      _
    // Predicated region
    $region26: #{tpu_custom_call.1} parent=1 // pred_check
      _
    $region27: #{tpu_custom_call.1} parent=1 // pred_check_branch
      %235 = sbr.rel (0) target = $region29
    $region28: #{tpu_custom_call.1} parent=1 // pred_region
      %236 = dma.done [#allocation4], 16
    $region29: #{tpu_custom_call.1} parent=1 // pred_fallthru
      _
    // Predicated region
    $region30: #{tpu_custom_call.1} parent=1 // pred_check
      _
    $region31: #{tpu_custom_call.1} parent=1 // pred_check_branch
      %238 = sbr.rel (0) target = $region33
    $region32: #{tpu_custom_call.1} parent=1 // pred_region
      %239 = dma.done [#allocation9], 16
    $region33: #{tpu_custom_call.1} parent=1 // pred_fallthru
      _
    %240 = vsyncpa [#allocation3], 1
    %241 = vsyncpa [#allocation6], 1
    %242 = vsyncpa [#allocation4], 1
    %243 = vsyncpa [#allocation9], 1

</llo_original>
